<compile_context>
chip_gen: v6e
topology: v6e:2x2x1
jax: 0.10.0
libtpu: 0.0.40
codegen_flags: <defaults>
</compile_context>

<pallas_src>
import functools

import jax
import jax.numpy as jnp
from jax import lax
from jax.experimental import pallas as pl
from jax.experimental.pallas import tpu as pltpu

_LANE = 128  # lane width / column-chunk size inside the kernel


def mlp_kernel(x_ref, w1_ref, b1_ref, w2_ref, b2_ref, w3_ref, b3_ref, o_ref,
               *, cw, n_chunks):
    # Resident parameters (loaded once per grid step, tiny).
    w1 = w1_ref[...]          # (24, 12)
    w2 = w2_ref[...]          # (16, 24)
    w3 = w3_ref[...]          # (3, 16)
    # Hoist the lane-broadcast of the biases out of the chunk loop
    # (JAX does not CSE broadcast_in_dim).
    b1 = jnp.broadcast_to(b1_ref[...], (24, cw))
    b2 = jnp.broadcast_to(b2_ref[...], (16, cw))
    b3 = jnp.broadcast_to(b3_ref[...], (3, cw))

    # Contract the feature axes of both operands: A (o,d) · B (b,d) -> (o,b).
    contract_feat = (((1,), (1,)), ((), ()))

    def sigmoid(h):
        # Exact identity: sigmoid(h) = 0.5*tanh(0.5*h) + 0.5
        # -> one EUP transcendental per element, VPU absorbs the mul/add.
        return 0.5 * jnp.tanh(0.5 * h) + 0.5

    # Statically unrolled chunk loop: static slice offsets, bounded live ranges
    # (per-chunk intermediates are ~40 vregs), straight-line code for the
    # LLO scheduler.
    for c in range(n_chunks):
        lo = c * cw
        xc = x_ref[lo:lo + cw, :]                       # (cw, 12) natural layout

        # First matmul also moves the batch onto the lane axis: (24, cw).
        h1 = sigmoid(
            lax.dot_general(w1, xc, contract_feat,
                            preferred_element_type=jnp.float32) + b1)
        # (16,24) @ (24,cw) -> (16,cw)
        h2 = sigmoid(jnp.dot(w2, h1, preferred_element_type=jnp.float32) + b2)
        # (3,16) @ (16,cw) -> (3,cw)
        z = jnp.dot(w3, h2, preferred_element_type=jnp.float32) + b3

        # log_softmax over the 3 classes (sublane axis). Applied once; the
        # second log_softmax in the PyTorch forward is mathematically a no-op.
        s = z - jnp.max(z, axis=0, keepdims=True)
        lse = jnp.log(jnp.sum(jnp.exp(s), axis=0, keepdims=True))
        o_ref[:, lo:lo + cw] = (s - lse).astype(o_ref.dtype)


def _round_up(n, m):
    return ((n + m - 1) // m) * m


@functools.partial(jax.jit, static_argnames=("tb",))
def mlp_forward(x, params, *, tb=4096):
    """x: (B, 12) float32 (natural layout). params: torch-style (out,in) / (out,)."""
    B = x.shape[0]
    x = x.astype(jnp.float32)

    # --- Tile / grid selection ------------------------------------------------
    # Big tiles to amortize the ~0.35us/step overhead; even, balanced step count
    # (>=2) whenever B > 128 so v7x's two TensorCores split the batch evenly.
    if B <= _LANE:
        n_steps = 1
        tile = _LANE
    else:
        n_steps = -(-B // tb)
        if n_steps == 1:
            n_steps = 2
        elif n_steps % 2:
            n_steps += 1
        tile = _round_up(-(-B // n_steps), _LANE)
    Bp = tile * n_steps
    n_chunks = tile // _LANE

    if Bp != B:
        # Single fused pad. Zero rows produce finite activations (sigmoid of the
        # bias-only logits), are never reduced across the batch, and are sliced off.
        x = jnp.pad(x, ((0, Bp - B), (0, 0)))

    w1, w2, w3 = params["w1"], params["w2"], params["w3"]
    b1 = params["b1"].reshape(-1, 1)
    b2 = params["b2"].reshape(-1, 1)
    b3 = params["b3"].reshape(-1, 1)

    def resident(shape):
        # Full-array block, constant block index -> loaded once, stays in VMEM.
        return pl.BlockSpec(shape, lambda i: (0, 0))

    cost = pl.CostEstimate(
        flops=2 * Bp * (12 * 24 + 24 * 16 + 16 * 3),
        transcendentals=Bp * (24 + 16 + 3 + 1),
        bytes_accessed=Bp * (12 + 3) * 4
        + (24 * 12 + 16 * 24 + 3 * 16 + 24 + 16 + 3) * 4,
    )

    kernel = functools.partial(mlp_kernel, cw=_LANE, n_chunks=n_chunks)

    out_t = pl.pallas_call(
        kernel,
        out_shape=jax.ShapeDtypeStruct((3, Bp), jnp.float32),
        grid=(n_steps,),
        in_specs=[
            pl.BlockSpec((tile, 12), lambda i: (i, 0)),   # natural-layout x tile (pipelined)
            resident((24, 12)),                           # w1
            resident((24, 1)),                            # b1
            resident((16, 24)),                           # w2
            resident((16, 1)),                            # b2
            resident((3, 16)),                            # w3
            resident((3, 1)),                             # b3
        ],
        out_specs=pl.BlockSpec((3, tile), lambda i: (0, i)),  # lane-dense output slab
        compiler_params=pltpu.CompilerParams(
            dimension_semantics=("parallel",),
            vmem_limit_bytes=32 * 1024 * 1024,
        ),
        cost_estimate=cost,
    )(x, w1, b1, w2, b2, w3, b3)

    # Tiny (3,B) -> (B,3) un-transpose (12 B/row) and drop padding.
    return out_t[:, :B].T


def init_params(key):
    """Deterministic synthetic parameters with torch nn.Linear shapes."""
    ks = jax.random.split(key, 6)

    def uinit(k, shape, fan_in):
        bound = 1.0 / jnp.sqrt(fan_in)
        return jax.random.uniform(k, shape, jnp.float32, -bound, bound)

    return {
        "w1": uinit(ks[0], (24, 12), 12),
        "b1": uinit(ks[1], (24,), 12),
        "w2": uinit(ks[2], (16, 24), 24),
        "b2": uinit(ks[3], (16,), 24),
        "w3": uinit(ks[4], (3, 16), 16),
        "b3": uinit(ks[5], (3,), 16),
    }


def _reference(x, params):
    h1 = jax.nn.sigmoid(x @ params["w1"].T + params["b1"])
    h2 = jax.nn.sigmoid(h1 @ params["w2"].T + params["b2"])
    z = h2 @ params["w3"].T + params["b3"]
    return jax.nn.log_softmax(jax.nn.log_softmax(z, axis=1), axis=1)


if __name__ == "__main__":
    key = jax.random.PRNGKey(0)
    k_params, k_x1, k_x2 = jax.random.split(key, 3)

    params = init_params(k_params)

    # Small shape consistent with the module: batch=2, features=12.
    x_small = jax.random.normal(k_x1, (2, 12), jnp.float32)
    out_small = jax.block_until_ready(mlp_forward(x_small, params))
    ref_small = _reference(x_small, params)
    assert out_small.shape == (2, 3)
    assert jnp.allclose(out_small, ref_small, atol=1e-5), (out_small, ref_small)

    # Larger, non-tile-aligned batch: exercises even-step grid, padding, chunks.
    x_big = jax.random.normal(k_x2, (2600, 12), jnp.float32)
    out_big = jax.block_until_ready(mlp_forward(x_big, params))
    ref_big = _reference(x_big, params)
    assert out_big.shape == (2600, 3)
    assert jnp.allclose(out_big, ref_big, atol=1e-5)

    print("KERNEL_OK")
</pallas_src>

<mosaic_0001>
module attributes {stable_mosaic.version = 11 : i64} {
  func.func @mlp_kernel(%arg0: i32, %arg1: memref<128x12xf32, #tpu.memory_space<vmem>>, %arg2: memref<24x12xf32, #tpu.memory_space<vmem>>, %arg3: memref<24x1xf32, #tpu.memory_space<vmem>>, %arg4: memref<16x24xf32, #tpu.memory_space<vmem>>, %arg5: memref<16x1xf32, #tpu.memory_space<vmem>>, %arg6: memref<3x16xf32, #tpu.memory_space<vmem>>, %arg7: memref<3x1xf32, #tpu.memory_space<vmem>>, %arg8: memref<3x128xf32, #tpu.memory_space<vmem>>) attributes {dimension_semantics = [#tpu.dimension_semantics<parallel>], iteration_bounds = array<i64: 1>, scalar_prefetch = 0 : i64, scratch_operands = 0 : i64, tpu.core_type = #tpu.core_type<tc>, window_params = [{transform_indices = @transform_0, window_bounds = array<i64: 128, 12>}, {pipeline_mode = #tpu.pipeline_mode<synchronous>, transform_indices = @transform_1, window_bounds = array<i64: 24, 12>}, {pipeline_mode = #tpu.pipeline_mode<synchronous>, transform_indices = @transform_2, window_bounds = array<i64: 24, 1>}, {pipeline_mode = #tpu.pipeline_mode<synchronous>, transform_indices = @transform_3, window_bounds = array<i64: 16, 24>}, {pipeline_mode = #tpu.pipeline_mode<synchronous>, transform_indices = @transform_4, window_bounds = array<i64: 16, 1>}, {pipeline_mode = #tpu.pipeline_mode<synchronous>, transform_indices = @transform_5, window_bounds = array<i64: 3, 16>}, {pipeline_mode = #tpu.pipeline_mode<synchronous>, transform_indices = @transform_6, window_bounds = array<i64: 3, 1>}, {transform_indices = @transform_7, window_bounds = array<i64: 3, 128>}]} {
    %c0 = arith.constant 0 : index
    %c0_0 = arith.constant 0 : index
    %0 = vector.load %arg2[%c0, %c0_0] : memref<24x12xf32, #tpu.memory_space<vmem>>, vector<24x12xf32>
    %c0_1 = arith.constant 0 : index
    %c0_2 = arith.constant 0 : index
    %1 = vector.load %arg4[%c0_1, %c0_2] : memref<16x24xf32, #tpu.memory_space<vmem>>, vector<16x24xf32>
    %c0_3 = arith.constant 0 : index
    %c0_4 = arith.constant 0 : index
    %2 = vector.load %arg6[%c0_3, %c0_4] : memref<3x16xf32, #tpu.memory_space<vmem>>, vector<3x16xf32>
    %c0_5 = arith.constant 0 : index
    %c0_6 = arith.constant 0 : index
    %3 = vector.load %arg3[%c0_5, %c0_6] : memref<24x1xf32, #tpu.memory_space<vmem>>, vector<24x1xf32>
    %4 = vector.shape_cast %3 : vector<24x1xf32> to vector<24x1xf32>
    %5 = vector.broadcast %4 : vector<24x1xf32> to vector<24x128xf32>
    %c0_7 = arith.constant 0 : index
    %c0_8 = arith.constant 0 : index
    %6 = vector.load %arg5[%c0_7, %c0_8] : memref<16x1xf32, #tpu.memory_space<vmem>>, vector<16x1xf32>
    %7 = vector.shape_cast %6 : vector<16x1xf32> to vector<16x1xf32>
    %8 = vector.broadcast %7 : vector<16x1xf32> to vector<16x128xf32>
    %c0_9 = arith.constant 0 : index
    %c0_10 = arith.constant 0 : index
    %9 = vector.load %arg7[%c0_9, %c0_10] : memref<3x1xf32, #tpu.memory_space<vmem>>, vector<3x1xf32>
    %10 = vector.shape_cast %9 : vector<3x1xf32> to vector<3x1xf32>
    %11 = vector.broadcast %10 : vector<3x1xf32> to vector<3x128xf32>
    %c0_11 = arith.constant 0 : index
    %c0_12 = arith.constant 0 : index
    %12 = vector.load %arg1[%c0_11, %c0_12] : memref<128x12xf32, #tpu.memory_space<vmem>>, vector<128x12xf32>
    %cst = arith.constant dense<0.000000e+00> : vector<24x128xf32>
    %13 = tpu.matmul %0, %12, %cst {dimension_numbers = #tpu.dot_dimension_numbers<[1], [1], [0], [0], [0, 0, 1, 0], [], []>} : vector<24x12xf32>, vector<128x12xf32>, vector<24x128xf32> -> vector<24x128xf32>
    %14 = arith.addf %13, %5 : vector<24x128xf32>
    %cst_13 = arith.constant 5.000000e-01 : f32
    %15 = vector.broadcast %cst_13 : f32 to vector<24x128xf32>
    %16 = arith.mulf %15, %14 : vector<24x128xf32>
    %17 = math.tanh %16 : vector<24x128xf32>
    %cst_14 = arith.constant 5.000000e-01 : f32
    %18 = vector.broadcast %cst_14 : f32 to vector<24x128xf32>
    %19 = arith.mulf %18, %17 : vector<24x128xf32>
    %cst_15 = arith.constant 5.000000e-01 : f32
    %20 = vector.broadcast %cst_15 : f32 to vector<24x128xf32>
    %21 = arith.addf %19, %20 : vector<24x128xf32>
    %cst_16 = arith.constant dense<0.000000e+00> : vector<16x128xf32>
    %22 = tpu.matmul %1, %21, %cst_16 {dimension_numbers = #tpu.dot_dimension_numbers<[1], [0], [0], [1], [0, 0, 1, 1], [], []>} : vector<16x24xf32>, vector<24x128xf32>, vector<16x128xf32> -> vector<16x128xf32>
    %23 = arith.addf %22, %8 : vector<16x128xf32>
    %cst_17 = arith.constant 5.000000e-01 : f32
    %24 = vector.broadcast %cst_17 : f32 to vector<16x128xf32>
    %25 = arith.mulf %24, %23 : vector<16x128xf32>
    %26 = math.tanh %25 : vector<16x128xf32>
    %cst_18 = arith.constant 5.000000e-01 : f32
    %27 = vector.broadcast %cst_18 : f32 to vector<16x128xf32>
    %28 = arith.mulf %27, %26 : vector<16x128xf32>
    %cst_19 = arith.constant 5.000000e-01 : f32
    %29 = vector.broadcast %cst_19 : f32 to vector<16x128xf32>
    %30 = arith.addf %28, %29 : vector<16x128xf32>
    %cst_20 = arith.constant dense<0.000000e+00> : vector<3x128xf32>
    %31 = tpu.matmul %2, %30, %cst_20 {dimension_numbers = #tpu.dot_dimension_numbers<[1], [0], [0], [1], [0, 0, 1, 1], [], []>} : vector<3x16xf32>, vector<16x128xf32>, vector<3x128xf32> -> vector<3x128xf32>
    %32 = arith.addf %31, %11 : vector<3x128xf32>
    %cst_21 = arith.constant dense<0xFF800000> : vector<128xf32>
    %33 = vector.multi_reduction <maximumf>, %32, %cst_21 [0] : vector<3x128xf32> to vector<128xf32>
    %34 = vector.shape_cast %33 : vector<128xf32> to vector<1x128xf32>
    %35 = vector.broadcast %34 : vector<1x128xf32> to vector<3x128xf32>
    %36 = arith.subf %32, %35 : vector<3x128xf32>
    %37 = math.exp %36 : vector<3x128xf32>
    %cst_22 = arith.constant dense<0.000000e+00> : vector<128xf32>
    %38 = vector.multi_reduction <add>, %37, %cst_22 [0] : vector<3x128xf32> to vector<128xf32>
    %39 = vector.shape_cast %38 : vector<128xf32> to vector<1x128xf32>
    %40 = math.log %39 : vector<1x128xf32>
    %41 = vector.broadcast %40 : vector<1x128xf32> to vector<3x128xf32>
    %42 = arith.subf %36, %41 : vector<3x128xf32>
    %c0_23 = arith.constant 0 : index
    %c0_24 = arith.constant 0 : index
    %43 = vector.load %arg8[%c0_23, %c0_24] : memref<3x128xf32, #tpu.memory_space<vmem>>, vector<3x128xf32>
    tpu.vector_store %arg8[%c0_23, %c0_24], %42 {strides = array<i32>} : memref<3x128xf32, #tpu.memory_space<vmem>>, vector<3x128xf32>,
    return
  }
  func.func @transform_0(%arg0: i32) -> (i32, i32) {
    %c0_i32 = arith.constant 0 : i32
    %c0_i32_0 = arith.constant 0 : i32
    return %arg0, %c0_i32 : i32, i32
  }
  func.func @transform_1(%arg0: i32) -> (i32, i32) {
    %c0_i32 = arith.constant 0 : i32
    %c0_i32_0 = arith.constant 0 : i32
    %c0_i32_1 = arith.constant 0 : i32
    return %c0_i32, %c0_i32_0 : i32, i32
  }
  func.func @transform_2(%arg0: i32) -> (i32, i32) {
    %c0_i32 = arith.constant 0 : i32
    %c0_i32_0 = arith.constant 0 : i32
    %c0_i32_1 = arith.constant 0 : i32
    return %c0_i32, %c0_i32_0 : i32, i32
  }
  func.func @transform_3(%arg0: i32) -> (i32, i32) {
    %c0_i32 = arith.constant 0 : i32
    %c0_i32_0 = arith.constant 0 : i32
    %c0_i32_1 = arith.constant 0 : i32
    return %c0_i32, %c0_i32_0 : i32, i32
  }
  func.func @transform_4(%arg0: i32) -> (i32, i32) {
    %c0_i32 = arith.constant 0 : i32
    %c0_i32_0 = arith.constant 0 : i32
    %c0_i32_1 = arith.constant 0 : i32
    return %c0_i32, %c0_i32_0 : i32, i32
  }
  func.func @transform_5(%arg0: i32) -> (i32, i32) {
    %c0_i32 = arith.constant 0 : i32
    %c0_i32_0 = arith.constant 0 : i32
    %c0_i32_1 = arith.constant 0 : i32
    return %c0_i32, %c0_i32_0 : i32, i32
  }
  func.func @transform_6(%arg0: i32) -> (i32, i32) {
    %c0_i32 = arith.constant 0 : i32
    %c0_i32_0 = arith.constant 0 : i32
    %c0_i32_1 = arith.constant 0 : i32
    return %c0_i32, %c0_i32_0 : i32, i32
  }
  func.func @transform_7(%arg0: i32) -> (i32, i32) {
    %c0_i32 = arith.constant 0 : i32
    %c0_i32_0 = arith.constant 0 : i32
    return %c0_i32, %arg0 : i32, i32
  }
}

</mosaic_0001>

<llo_original>
// kernel: mlp_forward.1
$region0: #{mlp_forward.1}
  #allocation0 [shape = 'u32[]', space=smem, size = 0x4, offset = 0x4, fixed_abs, tag = 'smem constant byte address 0x4 - core index']
  #allocation1 [shape = 'u32[144,128]{1,0:T(1,128)}', space=vmem, size = 0x12000, scoped, tag = 'internal scratch']
  %s0 = inlined_call_operand.vmem [shape: f32[128,12], index: 0, kind: input, shape index: {}]
  %s1 = inlined_call_operand.vmem [shape: f32[24,12], index: 1, kind: input, shape index: {}]
  %s2 = inlined_call_operand.vmem [shape: f32[24,1], index: 2, kind: input, shape index: {}]
  %s3 = inlined_call_operand.vmem [shape: f32[16,24], index: 3, kind: input, shape index: {}]
  %s4 = inlined_call_operand.vmem [shape: f32[16,1], index: 4, kind: input, shape index: {}]
  %s5 = inlined_call_operand.vmem [shape: f32[3,16], index: 5, kind: input, shape index: {}]
  %s6 = inlined_call_operand.vmem [shape: f32[3,1], index: 6, kind: input, shape index: {}]
  %s7 = inlined_call_operand.vmem [shape: f32[3,128], index: 7, kind: output, shape index: {}]
  %s8 = sld [smem:[#allocation0]]
  $region38: #{mlp_forward.1} parent=0
    _
  %s10 = ssub.s32 1, %s8
  %s11 = scalar_select 0, %s10, %s8
  // Predicated region
  $region2: #{mlp_forward.1} parent=0 // pred_check
    _
  $region3: #{mlp_forward.1} parent=0 // pred_check_branch
    %13 = sbr.rel (0) target = $region5
  $region4: #{mlp_forward.1} parent=0 // pred_region
    _
  $region5: #{mlp_forward.1} parent=0 // pred_fallthru
    _
  // Predicated region
  $region6: #{mlp_forward.1} parent=0 // pred_check
    _
  $region7: #{mlp_forward.1} parent=0 // pred_check_branch
    %15 = sbr.rel (0) target = $region9
  $region8: #{mlp_forward.1} parent=0 // pred_region
    _
  $region9: #{mlp_forward.1} parent=0 // pred_fallthru
    _
  // Predicated region
  $region10: #{mlp_forward.1} parent=0 // pred_check
    _
  $region11: #{mlp_forward.1} parent=0 // pred_check_branch
    %17 = sbr.rel (0) target = $region13
  $region12: #{mlp_forward.1} parent=0 // pred_region
    _
  $region13: #{mlp_forward.1} parent=0 // pred_fallthru
    _
  // Predicated region
  $region14: #{mlp_forward.1} parent=0 // pred_check
    _
  $region15: #{mlp_forward.1} parent=0 // pred_check_branch
    %19 = sbr.rel (0) target = $region17
  $region16: #{mlp_forward.1} parent=0 // pred_region
    _
  $region17: #{mlp_forward.1} parent=0 // pred_fallthru
    _
  // Predicated region
  $region18: #{mlp_forward.1} parent=0 // pred_check
    _
  $region19: #{mlp_forward.1} parent=0 // pred_check_branch
    %21 = sbr.rel (0) target = $region21
  $region20: #{mlp_forward.1} parent=0 // pred_region
    _
  $region21: #{mlp_forward.1} parent=0 // pred_fallthru
    _
  // Predicated region
  $region22: #{mlp_forward.1} parent=0 // pred_check
    _
  $region23: #{mlp_forward.1} parent=0 // pred_check_branch
    %23 = sbr.rel (0) target = $region25
  $region24: #{mlp_forward.1} parent=0 // pred_region
    _
  $region25: #{mlp_forward.1} parent=0 // pred_fallthru
    _
  // Predicated region
  $region26: #{mlp_forward.1} parent=0 // pred_check
    _
  $region27: #{mlp_forward.1} parent=0 // pred_check_branch
    %25 = sbr.rel (0) target = $region29
  $region28: #{mlp_forward.1} parent=0 // pred_region
    _
  $region29: #{mlp_forward.1} parent=0 // pred_fallthru
    _
  %v26 = vld [vmem:[%s1] sm:$0xff]
  %v27 = vld [vmem:[%s1 + $0x8] sm:$0xff]
  %v28 = vld [vmem:[%s1 + $0x10] sm:$0xff]
  %v29 = vld [vmem:[%s3] sm:$0xff]
  %v30 = vld [vmem:[%s3 + $0x8] sm:$0xff]
  %v31 = vld [vmem:[%s5] sm:$0x7]
  %v32 = vld [vmem:[%s2] sm:$0xff]
  %v33 = vld [vmem:[%s2 + $0x8] sm:$0xff]
  %v34 = vld [vmem:[%s2 + $0x10] sm:$0xff]
  %36 = vset.pattern.permute.xlu0 0
  %37 = vperm.xlu0 %36, %v32
  %v38 = vpop.permute.xlu0 %37
  %41 = vset.pattern.permute.xlu0 0
  %42 = vperm.xlu0 %41, %v33
  %v43 = vpop.permute.xlu0 %42
  %46 = vset.pattern.permute.xlu0 0
  %47 = vperm.xlu0 %46, %v34
  %v48 = vpop.permute.xlu0 %47
  %v50 = vld [vmem:[%s4] sm:$0xff]
  %v51 = vld [vmem:[%s4 + $0x8] sm:$0xff]
  %53 = vset.pattern.permute.xlu0 0
  %54 = vperm.xlu0 %53, %v50
  %v55 = vpop.permute.xlu0 %54
  %58 = vset.pattern.permute.xlu0 0
  %59 = vperm.xlu0 %58, %v51
  %v60 = vpop.permute.xlu0 %59
  %v62 = vld [vmem:[%s6] sm:$0x7]
  %64 = vset.pattern.permute.xlu0 0
  %65 = vperm.xlu0 %64, %v62
  %v66 = vpop.permute.xlu0 %65
  %v68 = vld [vmem:[%s0] sm:$0xff]
  %v69 = vld [vmem:[%s0 + $0x8] sm:$0xff]
  %v70 = vld [vmem:[%s0 + $0x10] sm:$0xff]
  %v71 = vld [vmem:[%s0 + $0x18] sm:$0xff]
  %v72 = vld [vmem:[%s0 + $0x20] sm:$0xff]
  %v73 = vld [vmem:[%s0 + $0x28] sm:$0xff]
  %v74 = vld [vmem:[%s0 + $0x30] sm:$0xff]
  %v75 = vld [vmem:[%s0 + $0x38] sm:$0xff]
  %v76 = vld [vmem:[%s0 + $0x40] sm:$0xff]
  %v77 = vld [vmem:[%s0 + $0x48] sm:$0xff]
  %v78 = vld [vmem:[%s0 + $0x50] sm:$0xff]
  %v79 = vld [vmem:[%s0 + $0x58] sm:$0xff]
  %v80 = vld [vmem:[%s0 + $0x60] sm:$0xff]
  %v81 = vld [vmem:[%s0 + $0x68] sm:$0xff]
  %v82 = vld [vmem:[%s0 + $0x70] sm:$0xff]
  %v83 = vld [vmem:[%s0 + $0x78] sm:$0xff]
  %vm84 = vcmask 97280
  %v86 = vsel %vm84, %v26, 0
  %v89 = vsel %vm84, %v27, 0
  %v92 = vsel %vm84, %v28, 0
  %v95 = vsel %vm84, %v68, 0
  %v98 = vsel %vm84, %v69, 0
  %v101 = vsel %vm84, %v70, 0
  %v104 = vsel %vm84, %v71, 0
  %v107 = vsel %vm84, %v72, 0
  %v110 = vsel %vm84, %v73, 0
  %v113 = vsel %vm84, %v74, 0
  %v116 = vsel %vm84, %v75, 0
  %v119 = vsel %vm84, %v76, 0
  %v122 = vsel %vm84, %v77, 0
  %v125 = vsel %vm84, %v78, 0
  %v128 = vsel %vm84, %v79, 0
  %v131 = vsel %vm84, %v80, 0
  %v134 = vsel %vm84, %v81, 0
  %v137 = vsel %vm84, %v82, 0
  %v140 = vsel %vm84, %v83, 0
  %142 = vmatprep.subr.mxu0 0.0
  %143 = vmatpush1.xpose.msra.mxu0 %v140
  %144 = vmatprep.subr.mxu0 0.0
  %145 = vmatpush1.xpose.msra.mxu0 %v137
  %146 = vmatprep.subr.mxu0 0.0
  %147 = vmatpush1.xpose.msra.mxu0 %v134
  %148 = vmatprep.subr.mxu0 0.0
  %149 = vmatpush1.xpose.msra.mxu0 %v131
  %150 = vmatprep.subr.mxu0 0.0
  %151 = vmatpush1.xpose.msra.mxu0 %v128
  %152 = vmatprep.subr.mxu0 0.0
  %153 = vmatpush1.xpose.msra.mxu0 %v125
  %154 = vmatprep.subr.mxu0 0.0
  %155 = vmatpush1.xpose.msra.mxu0 %v122
  %156 = vmatprep.subr.mxu0 0.0
  %157 = vmatpush1.xpose.msra.mxu0 %v119
  %158 = vmatprep.subr.mxu0 0.0
  %159 = vmatpush1.xpose.msra.mxu0 %v116
  %160 = vmatprep.subr.mxu0 0.0
  %161 = vmatpush1.xpose.msra.mxu0 %v113
  %162 = vmatprep.subr.mxu0 0.0
  %163 = vmatpush1.xpose.msra.mxu0 %v110
  %164 = vmatprep.subr.mxu0 0.0
  %165 = vmatpush1.xpose.msra.mxu0 %v107
  %166 = vmatprep.subr.mxu0 0.0
  %167 = vmatpush1.xpose.msra.mxu0 %v104
  %168 = vmatprep.subr.mxu0 0.0
  %169 = vmatpush1.xpose.msra.mxu0 %v101
  %170 = vmatprep.subr.mxu0 0.0
  %171 = vmatpush1.xpose.msra.mxu0 %v98
  %172 = vmatprep.subr.mxu0 0.0
  %173 = vmatpush1.xpose.msra.mxu0 %v95
  %174 = vmatprep.subr.mxu0 0.0
  %175 = vmatpush2.xpose.msra.mxu0 0.0
  %176 = vmatprep.subr.mxu0 0.0
  %177 = vmatpush2.xpose.msra.mxu0 0.0
  %178 = vmatprep.subr.mxu0 0.0
  %179 = vmatpush2.xpose.msra.mxu0 0.0
  %180 = vmatprep.subr.mxu0 0.0
  %181 = vmatpush2.xpose.msra.mxu0 0.0
  %182 = vmatprep.subr.mxu0 0.0
  %183 = vmatpush2.xpose.msra.mxu0 0.0
  %184 = vmatprep.subr.mxu0 0.0
  %185 = vmatpush2.xpose.msra.mxu0 0.0
  %186 = vmatprep.subr.mxu0 0.0
  %187 = vmatpush2.xpose.msra.mxu0 0.0
  %188 = vmatprep.subr.mxu0 0.0
  %189 = vmatpush2.xpose.msra.mxu0 0.0
  %190 = vmatprep.subr.mxu0 0.0
  %191 = vmatpush2.xpose.msra.mxu0 0.0
  %192 = vmatprep.subr.mxu0 0.0
  %193 = vmatpush2.xpose.msra.mxu0 0.0
  %194 = vmatprep.subr.mxu0 0.0
  %195 = vmatpush2.xpose.msra.mxu0 0.0
  %196 = vmatprep.subr.mxu0 0.0
  %197 = vmatpush2.xpose.msra.mxu0 0.0
  %198 = vmatprep.subr.mxu0 0.0
  %199 = vmatpush2.xpose.msra.mxu0 0.0
  %200 = vmatprep.subr.mxu0 0.0
  %201 = vmatpush2.xpose.msra.mxu0 0.0
  %202 = vmatprep.subr.mxu0 0.0
  %203 = vmatpush2.xpose.msra.mxu0 0.0
  %204 = vmatprep.subr.mxu0 0.0
  %205 = vmatpush2.xpose.msra.mxu0 0.0
  %206 = vmatprep.mubr.f32.mxu0 0.0
  %207 = vmatmul.mubr.f32.gmra.mxu0 %v86
  %v208 = vpop.f32.mrf.mxu0
  %v209 = vadd.f32 %v38, %v208
  %v210 = vpop.f32.mrf.mxu0
  %211 = vmatprep.mubr.f32.mxu0 0.0
  %212 = vmatmul.mubr.f32.gmra.mxu0 %v89
  %v213 = vpop.f32.mrf.mxu0
  %v214 = vadd.f32 %v43, %v213
  %v215 = vpop.f32.mrf.mxu0
  %216 = vmatprep.mubr.f32.mxu0 0.0
  %217 = vmatmul.mubr.f32.gmra.mxu0 %v92
  %v218 = vpop.f32.mrf.mxu0
  %v219 = vadd.f32 %v48, %v218
  %v220 = vpop.f32.mrf.mxu0
  %221 = vdwg.mxu0
  %v222 = vmul.f32 %v209, 0.5
  %v223 = vmul.f32 %v214, 0.5
  %v224 = vmul.f32 %v219, 0.5
  %v225 = vtanh.pop %v222
  %v226 = vtanh.pop %v223
  %v227 = vtanh.pop %v224
  %v228 = vmul.f32 %v225, 0.5
  %v229 = vmul.f32 %v226, 0.5
  %v230 = vmul.f32 %v227, 0.5
  %v231 = vadd.f32 %v228, 0.5
  %v232 = vadd.f32 %v229, 0.5
  %v233 = vadd.f32 %v230, 0.5
  %vm234 = vcmask 195584
  %v236 = vsel %vm234, %v29, 0
  %v239 = vsel %vm234, %v30, 0
  %241 = vmatprep.subr.mxu0 0.0
  %242 = vmatpush1.msra.mxu0 0.0
  %243 = vmatprep.subr.mxu0 0.0
  %244 = vmatpush1.msra.mxu0 0.0
  %245 = vmatprep.subr.mxu0 0.0
  %246 = vmatpush1.msra.mxu0 0.0
  %247 = vmatprep.subr.mxu0 0.0
  %248 = vmatpush1.msra.mxu0 0.0
  %249 = vmatprep.subr.mxu0 0.0
  %250 = vmatpush1.msra.mxu0 0.0
  %251 = vmatprep.subr.mxu0 0.0
  %252 = vmatpush1.msra.mxu0 0.0
  %253 = vmatprep.subr.mxu0 0.0
  %254 = vmatpush1.msra.mxu0 0.0
  %255 = vmatprep.subr.mxu0 0.0
  %256 = vmatpush1.msra.mxu0 0.0
  %257 = vmatprep.subr.mxu0 0.0
  %258 = vmatpush1.msra.mxu0 0.0
  %259 = vmatprep.subr.mxu0 0.0
  %260 = vmatpush1.msra.mxu0 0.0
  %261 = vmatprep.subr.mxu0 0.0
  %262 = vmatpush1.msra.mxu0 0.0
  %263 = vmatprep.subr.mxu0 0.0
  %264 = vmatpush1.msra.mxu0 0.0
  %265 = vmatprep.subr.mxu0 0.0
  %266 = vmatpush1.msra.mxu0 0.0
  %267 = vmatprep.subr.mxu0 0.0
  %268 = vmatpush1.msra.mxu0 %v233
  %269 = vmatprep.subr.mxu0 0.0
  %270 = vmatpush1.msra.mxu0 %v232
  %271 = vmatprep.subr.mxu0 0.0
  %272 = vmatpush1.msra.mxu0 %v231
  %273 = vmatprep.subr.mxu0 0.0
  %274 = vmatpush2.msra.mxu0 0.0
  %275 = vmatprep.subr.mxu0 0.0
  %276 = vmatpush2.msra.mxu0 0.0
  %277 = vmatprep.subr.mxu0 0.0
  %278 = vmatpush2.msra.mxu0 0.0
  %279 = vmatprep.subr.mxu0 0.0
  %280 = vmatpush2.msra.mxu0 0.0
  %281 = vmatprep.subr.mxu0 0.0
  %282 = vmatpush2.msra.mxu0 0.0
  %283 = vmatprep.subr.mxu0 0.0
  %284 = vmatpush2.msra.mxu0 0.0
  %285 = vmatprep.subr.mxu0 0.0
  %286 = vmatpush2.msra.mxu0 0.0
  %287 = vmatprep.subr.mxu0 0.0
  %288 = vmatpush2.msra.mxu0 0.0
  %289 = vmatprep.subr.mxu0 0.0
  %290 = vmatpush2.msra.mxu0 0.0
  %291 = vmatprep.subr.mxu0 0.0
  %292 = vmatpush2.msra.mxu0 0.0
  %293 = vmatprep.subr.mxu0 0.0
  %294 = vmatpush2.msra.mxu0 0.0
  %295 = vmatprep.subr.mxu0 0.0
  %296 = vmatpush2.msra.mxu0 0.0
  %297 = vmatprep.subr.mxu0 0.0
  %298 = vmatpush2.msra.mxu0 0.0
  %299 = vmatprep.subr.mxu0 0.0
  %300 = vmatpush2.msra.mxu0 0.0
  %301 = vmatprep.subr.mxu0 0.0
  %302 = vmatpush2.msra.mxu0 0.0
  %303 = vmatprep.subr.mxu0 0.0
  %304 = vmatpush2.msra.mxu0 0.0
  %305 = vmatprep.mubr.f32.mxu0 0.0
  %306 = vmatmul.mubr.f32.gmra.mxu0 %v236
  %v307 = vpop.f32.mrf.mxu0
  %v308 = vadd.f32 %v55, %v307
  %v309 = vpop.f32.mrf.mxu0
  %310 = vmatprep.mubr.f32.mxu0 0.0
  %311 = vmatmul.mubr.f32.gmra.mxu0 %v239
  %v312 = vpop.f32.mrf.mxu0
  %v313 = vadd.f32 %v60, %v312
  %v314 = vpop.f32.mrf.mxu0
  %315 = vdwg.mxu0
  %v316 = vmul.f32 %v308, 0.5
  %v317 = vmul.f32 %v313, 0.5
  %v318 = vtanh.pop %v316
  %v319 = vtanh.pop %v317
  %v320 = vmul.f32 %v318, 0.5
  %v321 = vmul.f32 %v319, 0.5
  %v322 = vadd.f32 %v320, 0.5
  %v323 = vadd.f32 %v321, 0.5
  %vm324 = vcmask 130048
  %v326 = vsel %vm324, %v31, 0
  %328 = vmatprep.subr.mxu0 0.0
  %329 = vmatpush1.msra.mxu0 0.0
  %330 = vmatprep.subr.mxu0 0.0
  %331 = vmatpush1.msra.mxu0 0.0
  %332 = vmatprep.subr.mxu0 0.0
  %333 = vmatpush1.msra.mxu0 0.0
  %334 = vmatprep.subr.mxu0 0.0
  %335 = vmatpush1.msra.mxu0 0.0
  %336 = vmatprep.subr.mxu0 0.0
  %337 = vmatpush1.msra.mxu0 0.0
  %338 = vmatprep.subr.mxu0 0.0
  %339 = vmatpush1.msra.mxu0 0.0
  %340 = vmatprep.subr.mxu0 0.0
  %341 = vmatpush1.msra.mxu0 0.0
  %342 = vmatprep.subr.mxu0 0.0
  %343 = vmatpush1.msra.mxu0 0.0
  %344 = vmatprep.subr.mxu0 0.0
  %345 = vmatpush1.msra.mxu0 0.0
  %346 = vmatprep.subr.mxu0 0.0
  %347 = vmatpush1.msra.mxu0 0.0
  %348 = vmatprep.subr.mxu0 0.0
  %349 = vmatpush1.msra.mxu0 0.0
  %350 = vmatprep.subr.mxu0 0.0
  %351 = vmatpush1.msra.mxu0 0.0
  %352 = vmatprep.subr.mxu0 0.0
  %353 = vmatpush1.msra.mxu0 0.0
  %354 = vmatprep.subr.mxu0 0.0
  %355 = vmatpush1.msra.mxu0 0.0
  %356 = vmatprep.subr.mxu0 0.0
  %357 = vmatpush1.msra.mxu0 %v323
  %358 = vmatprep.subr.mxu0 0.0
  %359 = vmatpush1.msra.mxu0 %v322
  %360 = vmatprep.subr.mxu0 0.0
  %361 = vmatpush2.msra.mxu0 0.0
  %362 = vmatprep.subr.mxu0 0.0
  %363 = vmatpush2.msra.mxu0 0.0
  %364 = vmatprep.subr.mxu0 0.0
  %365 = vmatpush2.msra.mxu0 0.0
  %366 = vmatprep.subr.mxu0 0.0
  %367 = vmatpush2.msra.mxu0 0.0
  %368 = vmatprep.subr.mxu0 0.0
  %369 = vmatpush2.msra.mxu0 0.0
  %370 = vmatprep.subr.mxu0 0.0
  %371 = vmatpush2.msra.mxu0 0.0
  %372 = vmatprep.subr.mxu0 0.0
  %373 = vmatpush2.msra.mxu0 0.0
  %374 = vmatprep.subr.mxu0 0.0
  %375 = vmatpush2.msra.mxu0 0.0
  %376 = vmatprep.subr.mxu0 0.0
  %377 = vmatpush2.msra.mxu0 0.0
  %378 = vmatprep.subr.mxu0 0.0
  %379 = vmatpush2.msra.mxu0 0.0
  %380 = vmatprep.subr.mxu0 0.0
  %381 = vmatpush2.msra.mxu0 0.0
  %382 = vmatprep.subr.mxu0 0.0
  %383 = vmatpush2.msra.mxu0 0.0
  %384 = vmatprep.subr.mxu0 0.0
  %385 = vmatpush2.msra.mxu0 0.0
  %386 = vmatprep.subr.mxu0 0.0
  %387 = vmatpush2.msra.mxu0 0.0
  %388 = vmatprep.subr.mxu0 0.0
  %389 = vmatpush2.msra.mxu0 0.0
  %390 = vmatprep.subr.mxu0 0.0
  %391 = vmatpush2.msra.mxu0 0.0
  %392 = vmatprep.mubr.f32.mxu0 0.0
  %393 = vmatmul.mubr.f32.gmra.mxu0 %v326
  %v394 = vpop.f32.mrf.mxu0
  %v395 = vadd.f32 %v66, %v394
  %v396 = vpop.f32.mrf.mxu0
  %397 = vdwg.mxu0
  %vm398 = vcmask 1042432
  %v399 = vsel %vm398, %v395, -inf
  %v400 = vrot.slane %v399, 4
  %v401 = vmax.f32 %v399, %v400
  %v402 = vrot.slane %v401, 2
  %v403 = vmax.f32 %v401, %v402
  %v404 = vrot.slane %v403, 1
  %v405 = vmax.f32 %v403, %v404
  %v406 = vsub.f32 %v395, %v405
  %v407 = vmul.f32 %v406, 1.442695
  %v408 = vpow.pop %v407
  %v409 = vsel %vm398, %v408, 0.0
  %v410 = vrot.slane %v409, 4
  %v411 = vadd.f32 %v409, %v410
  %v412 = vrot.slane %v411, 2
  %v413 = vadd.f32 %v411, %v412
  %v414 = vrot.slane %v413, 1
  %v415 = vadd.f32 %v413, %v414
  %v416 = vlog2.pop %v415
  %v417 = vmul.f32 %v416, 0.6931472
  %v418 = vsub.f32 %v406, %v417
  %419 = vst [vmem:[%s7] sm:$0x7] %v418
  // Predicated region
  $region30: #{mlp_forward.1} parent=0 // pred_check
    _
  $region31: #{mlp_forward.1} parent=0 // pred_check_branch
    %421 = sbr.rel (0) target = $region33
  $region32: #{mlp_forward.1} parent=0 // pred_region
    _
  $region33: #{mlp_forward.1} parent=0 // pred_fallthru
    _
  // Predicated region
  $region34: #{mlp_forward.1} parent=0 // pred_check
    _
  $region35: #{mlp_forward.1} parent=0 // pred_check_branch
    %423 = sbr.rel (0) target = $region37
  $region36: #{mlp_forward.1} parent=0 // pred_region
    _
  $region37: #{mlp_forward.1} parent=0 // pred_fallthru
    _

</llo_original>
